<compile_context>
chip_gen: v7x
topology: tpu7x:2x2x1
jax: 0.10.0
libtpu: 0.0.40
codegen_flags: <defaults>
</compile_context>

<pallas_src>
import functools

import jax
import jax.numpy as jnp
from jax.experimental import pallas as pl
from jax.experimental.pallas import tpu as pltpu


def _round_up(x, m):
    return ((x + m - 1) // m) * m


def _cross_entropy_kernel(logits_ref, tgt_ref, nll_ref, m_ref, l_ref, p_ref, *, num_classes):
    # logits_ref: (TN, TC) native dtype   tgt_ref: (TN, 1) i32
    # nll_ref:    (TN, 1)  f32 output (written on last C step)
    # m_ref/l_ref/p_ref: (TN, 1) f32 scratch (running max / running sumexp / picked logit)
    k = pl.program_id(1)
    num_k = pl.num_programs(1)
    tn, tc = logits_ref.shape

    @pl.when(k == 0)
    def _init():
        m_ref[...] = jnp.full_like(m_ref, -jnp.inf)
        l_ref[...] = jnp.zeros_like(l_ref)
        p_ref[...] = jnp.zeros_like(p_ref)

    # (1, TC) lane iota, reused for both the tail mask and the target pick.
    lane = jax.lax.broadcasted_iota(jnp.int32, (1, tc), 1)

    x_native = logits_ref[...]                                    # (TN, TC) native dtype
    x = x_native.astype(jnp.float32)

    has_c_tail = (num_classes % tc) != 0                          # static Python bool
    if has_c_tail:
        # Columns >= num_classes (only ever present on the last C tile) must not
        # contribute: mask with -inf so exp() -> 0 and the running max is unaffected.
        valid_col = lane < (num_classes - k * tc)                 # (1, TC)
        x = jnp.where(valid_col, x, -jnp.inf)
        tile_max = jnp.max(x, axis=-1, keepdims=True)             # (TN, 1) f32
    else:
        # Max on the native-dtype tile (bf16 VALU runs packed at 2x on v6e/v7x);
        # only the (TN, 1) result is upcast.
        tile_max = jnp.max(x_native, axis=-1, keepdims=True).astype(jnp.float32)

    # Target-class gather via one-hot select.  Shift the (TN,1) target by the tile
    # start and compare against the (1,TC) lane iota (no (TN,TC) iota materialized).
    # Exactly one C tile matches per valid row; all others contribute 0.
    tgt_rel = tgt_ref[...] - k * tc                               # (TN, 1) i32
    p_ref[...] += jnp.sum(jnp.where(lane == tgt_rel, x, 0.0), axis=-1, keepdims=True)

    # Online softmax accumulation over C tiles.
    m_prev = m_ref[...]
    m_new = jnp.maximum(m_prev, tile_max)
    scale = jnp.exp(m_prev - m_new)                               # (TN, 1); 0 on first step
    l_ref[...] = l_ref[...] * scale + jnp.sum(jnp.exp(x - m_new), axis=-1, keepdims=True)
    m_ref[...] = m_new

    @pl.when(k == num_k - 1)
    def _finalize():
        # nll = logsumexp(x) - x[target] = m + log(l) - picked
        nll_ref[...] = (m_ref[...] + jnp.log(l_ref[...]) - p_ref[...]).astype(nll_ref.dtype)


@functools.partial(jax.jit, static_argnames=("block_n", "block_c"))
def cross_entropy(logits, targets, *, block_n=256, block_c=8192):
    """nn.CrossEntropyLoss() forward: logits (N, C), targets (N,) int -> scalar f32."""
    n, c = logits.shape
    itemsize = jnp.dtype(logits.dtype).itemsize

    # Sublane multiple: 8 for 4-byte dtypes, 16 for 2-byte (bf16) packing.
    sub = 8 if itemsize >= 4 else 16
    tn = _round_up(min(block_n, _round_up(n, sub)), sub)
    tc = _round_up(min(block_c, _round_up(c, 128)), 128)

    grid = (pl.cdiv(n, tn), pl.cdiv(c, tc))

    tgt_i32 = targets.astype(jnp.int32)
    tgt_2d = tgt_i32.reshape(n, 1)

    # VMEM budget: the double-buffered logits tile dominates.  Defaults give ~32 MiB,
    # safe on v5e/v6e (128 MiB physical) and v7x (64 MiB physical per TensorCore).
    logits_block_bytes = tn * tc * itemsize
    vmem_limit = max(2 * logits_block_bytes + (4 << 20), 32 << 20)

    kernel = functools.partial(_cross_entropy_kernel, num_classes=c)

    nll = pl.pallas_call(
        kernel,
        out_shape=jax.ShapeDtypeStruct((n, 1), jnp.float32),
        grid_spec=pltpu.PrefetchScalarGridSpec(
            num_scalar_prefetch=0,
            grid=grid,
            in_specs=[
                # Logits tiled over (N, C); native dtype streamed from HBM.
                pl.BlockSpec((tn, tc), lambda i, k: (i, k)),
                # Targets: only the current row tile; reused across all C steps.
                pl.BlockSpec((tn, 1), lambda i, k: (i, 0)),
            ],
            out_specs=pl.BlockSpec((tn, 1), lambda i, k: (i, 0)),
            scratch_shapes=[pltpu.VMEM((tn, 1), jnp.float32)] * 3,
        ),
        compiler_params=pltpu.CompilerParams(
            # N tiles are independent (megacore-shardable on v7x); C is the reduction.
            dimension_semantics=("parallel", "arbitrary"),
            vmem_limit_bytes=vmem_limit,
        ),
    )(logits, tgt_2d)

    nll = nll[:, 0]
    # Mean over valid rows.  Out-of-range / negative targets (incl. ignore_index=-100)
    # are excluded from both the sum and the divisor.
    # TODO(synk): per-class weights / label_smoothing of nn.CrossEntropyLoss are not implemented.
    valid = (tgt_i32 >= 0) & (tgt_i32 < c)
    count = jnp.maximum(jnp.sum(valid.astype(jnp.float32)), 1.0)
    return jnp.sum(jnp.where(valid, nll, 0.0)) / count


def _reference_cross_entropy(logits, targets):
    logp = jax.nn.log_softmax(logits.astype(jnp.float32), axis=-1)
    nll = -jnp.take_along_axis(logp, targets.reshape(-1, 1).astype(jnp.int32), axis=-1)[:, 0]
    return jnp.mean(nll)


if __name__ == "__main__":
    key = jax.random.PRNGKey(0)
    k1, k2 = jax.random.split(key)

    # Small shapes; deliberately non-multiples of the tiles to exercise the in-kernel
    # ragged-N / ragged-C handling (no wrapper-side pad anymore).
    N, C = 10, 200
    logits_f32 = jax.random.normal(k1, (N, C), dtype=jnp.float32)
    targets = jax.random.randint(k2, (N,), 0, C, dtype=jnp.int32)

    # f32 path, small tiles so the grid is genuinely (2, 2) with partial tail blocks.
    loss = jax.block_until_ready(cross_entropy(logits_f32, targets, block_n=8, block_c=128))
    ref = jax.block_until_ready(_reference_cross_entropy(logits_f32, targets))
    assert jnp.allclose(loss, ref, atol=1e-5, rtol=1e-5), (loss, ref)

    # f32 path with default (large) tiles: single-tile grid, C tail masked in-kernel.
    loss_d = jax.block_until_ready(cross_entropy(logits_f32, targets))
    assert jnp.allclose(loss_d, ref, atol=1e-5, rtol=1e-5), (loss_d, ref)

    # bf16 path (native-dtype streaming + native-dtype tile max, f32 math inside).
    logits_bf16 = logits_f32.astype(jnp.bfloat16)
    loss_bf = jax.block_until_ready(cross_entropy(logits_bf16, targets, block_n=16, block_c=128))
    ref_bf = jax.block_until_ready(_reference_cross_entropy(logits_bf16, targets))
    assert jnp.allclose(loss_bf, ref_bf, atol=1e-3, rtol=1e-3), (loss_bf, ref_bf)

    print("KERNEL_OK")
</pallas_src>

<mosaic_0001>
module attributes {stable_mosaic.version = 11 : i64} {
  func.func @_cross_entropy_kernel(%arg0: i32, %arg1: i32, %arg2: memref<8x128xf32, #tpu.memory_space<vmem>>, %arg3: memref<8x1xi32, #tpu.memory_space<vmem>>, %arg4: memref<8x1xf32, #tpu.memory_space<vmem>>, %arg5: memref<8x1xf32, #tpu.memory_space<vmem>>, %arg6: memref<8x1xf32, #tpu.memory_space<vmem>>, %arg7: memref<8x1xf32, #tpu.memory_space<vmem>>) attributes {dimension_semantics = [#tpu.dimension_semantics<parallel>, #tpu.dimension_semantics<arbitrary>], iteration_bounds = array<i64: 2, 2>, scalar_prefetch = 0 : i64, scratch_operands = 3 : i64, tpu.core_type = #tpu.core_type<tc>, window_params = [{transform_indices = @transform_0, window_bounds = array<i64: 8, 128>}, {transform_indices = @transform_1, window_bounds = array<i64: 8, 1>}, {transform_indices = @transform_2, window_bounds = array<i64: 8, 1>}]} {
    %c0_i32 = arith.constant 0 : i32
    %0 = arith.cmpi eq, %arg1, %c0_i32 : i32
    %1 = arith.extui %0 : i1 to i32
    %c0_i32_0 = arith.constant 0 : i32
    %2 = arith.cmpi ne, %1, %c0_i32_0 : i32
    scf.if %2 {
      %cst_22 = arith.constant 0xFF800000 : f32
      %46 = vector.broadcast %cst_22 : f32 to vector<8x1xf32>
      %c0_23 = arith.constant 0 : index
      %c0_24 = arith.constant 0 : index
      %47 = vector.load %arg5[%c0_23, %c0_24] : memref<8x1xf32, #tpu.memory_space<vmem>>, vector<8x1xf32>
      tpu.vector_store %arg5[%c0_23, %c0_24], %46 {strides = array<i32>} : memref<8x1xf32, #tpu.memory_space<vmem>>, vector<8x1xf32>,
      %cst_25 = arith.constant 0.000000e+00 : f32
      %48 = vector.broadcast %cst_25 : f32 to vector<8x1xf32>
      %c0_26 = arith.constant 0 : index
      %c0_27 = arith.constant 0 : index
      %49 = vector.load %arg6[%c0_26, %c0_27] : memref<8x1xf32, #tpu.memory_space<vmem>>, vector<8x1xf32>
      tpu.vector_store %arg6[%c0_26, %c0_27], %48 {strides = array<i32>} : memref<8x1xf32, #tpu.memory_space<vmem>>, vector<8x1xf32>,
      %cst_28 = arith.constant 0.000000e+00 : f32
      %50 = vector.broadcast %cst_28 : f32 to vector<8x1xf32>
      %c0_29 = arith.constant 0 : index
      %c0_30 = arith.constant 0 : index
      %51 = vector.load %arg7[%c0_29, %c0_30] : memref<8x1xf32, #tpu.memory_space<vmem>>, vector<8x1xf32>
      tpu.vector_store %arg7[%c0_29, %c0_30], %50 {strides = array<i32>} : memref<8x1xf32, #tpu.memory_space<vmem>>, vector<8x1xf32>,
    } else {
    }
    %3 = tpu.iota {dimensions = array<i32: 1>} : vector<1x128xi32>
    %c0 = arith.constant 0 : index
    %c0_1 = arith.constant 0 : index
    %4 = vector.load %arg2[%c0, %c0_1] : memref<8x128xf32, #tpu.memory_space<vmem>>, vector<8x128xf32>
    %c128_i32 = arith.constant 128 : i32
    %5 = arith.muli %arg1, %c128_i32 : i32
    %c200_i32 = arith.constant 200 : i32
    %6 = arith.subi %c200_i32, %5 : i32
    %7 = vector.broadcast %6 : i32 to vector<1x128xi32>
    %8 = arith.cmpi slt, %3, %7 : vector<1x128xi32>
    %cst = arith.constant 0xFF800000 : f32
    %9 = vector.shape_cast %8 : vector<1x128xi1> to vector<1x128xi1>
    %10 = vector.broadcast %9 : vector<1x128xi1> to vector<8x128xi1>
    %11 = vector.broadcast %cst : f32 to vector<8x128xf32>
    %12 = arith.select %10, %4, %11 : vector<8x128xi1>, vector<8x128xf32>
    %cst_2 = arith.constant dense<0xFF800000> : vector<8xf32>
    %13 = vector.multi_reduction <maximumf>, %12, %cst_2 [1] : vector<8x128xf32> to vector<8xf32>
    %14 = vector.shape_cast %13 : vector<8xf32> to vector<8x1xf32>
    %c0_3 = arith.constant 0 : index
    %c0_4 = arith.constant 0 : index
    %15 = vector.load %arg3[%c0_3, %c0_4] : memref<8x1xi32, #tpu.memory_space<vmem>>, vector<8x1xi32>
    %c128_i32_5 = arith.constant 128 : i32
    %16 = arith.muli %arg1, %c128_i32_5 : i32
    %17 = vector.broadcast %16 : i32 to vector<8x1xi32>
    %18 = arith.subi %15, %17 : vector<8x1xi32>
    %c0_6 = arith.constant 0 : index
    %c0_7 = arith.constant 0 : index
    %19 = vector.load %arg7[%c0_6, %c0_7] : memref<8x1xf32, #tpu.memory_space<vmem>>, vector<8x1xf32>
    %20 = vector.broadcast %3 : vector<1x128xi32> to vector<8x128xi32>
    %21 = vector.broadcast %18 : vector<8x1xi32> to vector<8x128xi32>
    %22 = arith.cmpi eq, %20, %21 : vector<8x128xi32>
    %cst_8 = arith.constant 0.000000e+00 : f32
    %23 = vector.broadcast %cst_8 : f32 to vector<8x128xf32>
    %24 = arith.select %22, %12, %23 : vector<8x128xi1>, vector<8x128xf32>
    %cst_9 = arith.constant dense<0.000000e+00> : vector<8xf32>
    %25 = vector.multi_reduction <add>, %24, %cst_9 [1] : vector<8x128xf32> to vector<8xf32>
    %26 = vector.shape_cast %25 : vector<8xf32> to vector<8x1xf32>
    %27 = arith.addf %19, %26 : vector<8x1xf32>
    %c0_10 = arith.constant 0 : index
    %c0_11 = arith.constant 0 : index
    %28 = vector.load %arg7[%c0_10, %c0_11] : memref<8x1xf32, #tpu.memory_space<vmem>>, vector<8x1xf32>
    tpu.vector_store %arg7[%c0_10, %c0_11], %27 {strides = array<i32>} : memref<8x1xf32, #tpu.memory_space<vmem>>, vector<8x1xf32>,
    %c0_12 = arith.constant 0 : index
    %c0_13 = arith.constant 0 : index
    %29 = vector.load %arg5[%c0_12, %c0_13] : memref<8x1xf32, #tpu.memory_space<vmem>>, vector<8x1xf32>
    %30 = arith.maximumf %29, %14 : vector<8x1xf32>
    %31 = arith.subf %29, %30 : vector<8x1xf32>
    %32 = math.exp %31 : vector<8x1xf32>
    %c0_14 = arith.constant 0 : index
    %c0_15 = arith.constant 0 : index
    %33 = vector.load %arg6[%c0_14, %c0_15] : memref<8x1xf32, #tpu.memory_space<vmem>>, vector<8x1xf32>
    %34 = arith.mulf %33, %32 : vector<8x1xf32>
    %35 = vector.broadcast %30 : vector<8x1xf32> to vector<8x128xf32>
    %36 = arith.subf %12, %35 : vector<8x128xf32>
    %37 = math.exp %36 : vector<8x128xf32>
    %cst_16 = arith.constant dense<0.000000e+00> : vector<8xf32>
    %38 = vector.multi_reduction <add>, %37, %cst_16 [1] : vector<8x128xf32> to vector<8xf32>
    %39 = vector.shape_cast %38 : vector<8xf32> to vector<8x1xf32>
    %40 = arith.addf %34, %39 : vector<8x1xf32>
    %c0_17 = arith.constant 0 : index
    %c0_18 = arith.constant 0 : index
    %41 = vector.load %arg6[%c0_17, %c0_18] : memref<8x1xf32, #tpu.memory_space<vmem>>, vector<8x1xf32>
    tpu.vector_store %arg6[%c0_17, %c0_18], %40 {strides = array<i32>} : memref<8x1xf32, #tpu.memory_space<vmem>>, vector<8x1xf32>,
    %c0_19 = arith.constant 0 : index
    %c0_20 = arith.constant 0 : index
    %42 = vector.load %arg5[%c0_19, %c0_20] : memref<8x1xf32, #tpu.memory_space<vmem>>, vector<8x1xf32>
    tpu.vector_store %arg5[%c0_19, %c0_20], %30 {strides = array<i32>} : memref<8x1xf32, #tpu.memory_space<vmem>>, vector<8x1xf32>,
    %c1_i32 = arith.constant 1 : i32
    %43 = arith.cmpi eq, %arg1, %c1_i32 : i32
    %44 = arith.extui %43 : i1 to i32
    %c0_i32_21 = arith.constant 0 : i32
    %45 = arith.cmpi ne, %44, %c0_i32_21 : i32
    scf.if %45 {
      %c0_22 = arith.constant 0 : index
      %c0_23 = arith.constant 0 : index
      %46 = vector.load %arg5[%c0_22, %c0_23] : memref<8x1xf32, #tpu.memory_space<vmem>>, vector<8x1xf32>
      %c0_24 = arith.constant 0 : index
      %c0_25 = arith.constant 0 : index
      %47 = vector.load %arg6[%c0_24, %c0_25] : memref<8x1xf32, #tpu.memory_space<vmem>>, vector<8x1xf32>
      %48 = math.log %47 : vector<8x1xf32>
      %49 = arith.addf %46, %48 : vector<8x1xf32>
      %c0_26 = arith.constant 0 : index
      %c0_27 = arith.constant 0 : index
      %50 = vector.load %arg7[%c0_26, %c0_27] : memref<8x1xf32, #tpu.memory_space<vmem>>, vector<8x1xf32>
      %51 = arith.subf %49, %50 : vector<8x1xf32>
      %c0_28 = arith.constant 0 : index
      %c0_29 = arith.constant 0 : index
      %52 = vector.load %arg4[%c0_28, %c0_29] : memref<8x1xf32, #tpu.memory_space<vmem>>, vector<8x1xf32>
      tpu.vector_store %arg4[%c0_28, %c0_29], %51 {strides = array<i32>} : memref<8x1xf32, #tpu.memory_space<vmem>>, vector<8x1xf32>,
    } else {
    }
    return
  }
  func.func @transform_0(%arg0: i32, %arg1: i32) -> (i32, i32) {
    %c0_i32 = arith.constant 0 : i32
    return %arg0, %arg1 : i32, i32
  }
  func.func @transform_1(%arg0: i32, %arg1: i32) -> (i32, i32) {
    %c0_i32 = arith.constant 0 : i32
    %c0_i32_0 = arith.constant 0 : i32
    return %arg0, %c0_i32 : i32, i32
  }
  func.func @transform_2(%arg0: i32, %arg1: i32) -> (i32, i32) {
    %c0_i32 = arith.constant 0 : i32
    %c0_i32_0 = arith.constant 0 : i32
    return %arg0, %c0_i32 : i32, i32
  }
}

</mosaic_0001>

<llo_original>
// kernel: cross_entropy.1
$region0: #{cross_entropy.1}
  #allocation0 [shape = 'u32[]', space=smem, size = 0x4, offset = 0x4, fixed_abs, tag = 'smem constant byte address 0x4 - core index']
  #allocation1 [shape = 'u32[144,128]{1,0:T(1,128)}', space=vmem, size = 0x12000, scoped, tag = 'internal scratch']
  #allocation2 [shape = 'f32[8,1]{1,0:T(8,128)}', space=vmem, size = 0x1000, scoped, tag = 'scratch operand']
  #allocation3 [shape = 'f32[8,1]{1,0:T(8,128)}', space=vmem, size = 0x1000, scoped, tag = 'scratch operand']
  #allocation4 [shape = 'f32[8,1]{1,0:T(8,128)}', space=vmem, size = 0x1000, scoped, tag = 'scratch operand']
  %s0 = inlined_call_operand.hbm [shape: f32[10,200], index: 0, kind: input, shape index: {}]
  %s1 = inlined_call_operand.vmem [shape: s32[10,1], index: 1, kind: input, shape index: {}]
  %s2 = inlined_call_operand.vmem [shape: f32[10,1], index: 2, kind: output, shape index: {}]
  %s3 = sld [smem:[#allocation0]]
  $region53: #{cross_entropy.1} parent=0
    _
  %s5 = ssub.s32 1, %s3
  %s6 = scalar_select 0, %s5, %s3
  $region1: #{cross_entropy.1} parent=0
    #allocation5 [shape = 'u8[8192]{0}', space=vmem, size = 0x2000, scoped, tag = 'input window, operand 0']
    #allocation6 [shape = 's32[2]{0}', space=sflag, size = 0x8, scoped, tag = 'scoped memory for cross_entropy.1']
    %7 = vsyncpa [#allocation6], 0
    %s8 = scalar_lea.sflag [#allocation6], 1
    %9 = vsyncpa %s8, 0
    loop: start=0, step=1, limit=6
    $region2: #{cross_entropy.1} parent=1 // loop_pre_header
      _
    $region3: #{cross_entropy.1} parent=1 // loop_header
      %s11 = sphi 0, %s15
      %p12 = scmp.ge.s32.totalorder %s11, 6
      %s18 = sphi 0, %s30
      %s19 = sphi 0, %s26
      %s20 = sphi 0, %s18
      %s21 = sphi 0, %s19
      %s22 = sphi 0, %s20
      %s23 = sphi 0, %s21
      %s35 = sphi 0, %s37
      %s38 = sphi 0, %s35
      %s39 = sphi 0, %s38
      %s55 = sphi 0, %s39
      %s61 = sphi 0, %s63
      %s64 = sphi 0, %s61
      %s65 = sphi 0, %s64
      %s81 = sphi 0, %s65
      %s87 = sphi 0, %s89
      %s90 = sphi 0, %s87
      %s91 = sphi 0, %s90
      %s107 = sphi 0, %s91
    $region4: #{cross_entropy.1} parent=1 // loop_header_branch
      %14 = sbr.rel (%p12) target = $region8
    $region5: #{cross_entropy.1} parent=1 // loop_body
      %s16 = ssub.s32 %s11, 1
      %s17 = ssub.s32 %s11, 2
      %s24 = sadd.s32 1, %s19
      %p25 = scmp.ge.s32.totalorder %s24, 2
      %s26 = scalar_select %p25, 0, %s24
      %s27 = sadd.s32 1, %s18
      %s28 = scalar_select %p25, %s27, %s18
      %p29 = scmp.ge.s32.totalorder %s28, 2
      %s30 = scalar_select %p29, 0, %s28
      %s31 = ssub.s32 %s18, %s30
      %s32 = ssub.s32 %s19, %s26
      %s33 = sor.u32 %s31, %s32
      %p34 = scmp.eq.s32.totalorder %s33, 0
      %s36 = sadd.s32 %s35, 1
      %s37 = scalar_select %p34, %s35, %s36
      %p40 = pneg %p34
      %p41 = scmp.eq.s32.totalorder %s11, 3
      %p42 = por %p40, %p41
      %p43 = scmp.ne.s32.totalorder %s35, %s38
      %p44 = scmp.eq.s32.totalorder %s11, 0
      %p45 = por %p43, %p44
      %p46 = scmp.ne.s32.totalorder %s35, %s38
      %p47 = scmp.eq.s32.totalorder %s16, 3
      %p48 = por %p46, %p47
      %p49 = scmp.ne.s32.totalorder %s38, %s39
      %p50 = scmp.eq.s32.totalorder %s16, 0
      %p51 = por %p49, %p50
      %p52 = scmp.ne.s32.totalorder %s38, %s39
      %p53 = scmp.eq.s32.totalorder %s17, 3
      %p54 = por %p52, %p53
      %p56 = scmp.ne.s32.totalorder %s39, %s55
      %p57 = scmp.eq.s32.totalorder %s17, 0
      %p58 = por %p56, %p57
      %s59 = ssub.s32 %s18, %s30
      %p60 = scmp.eq.s32.totalorder %s59, 0
      %s62 = sadd.s32 %s61, 1
      %s63 = scalar_select %p60, %s61, %s62
      %p66 = pneg %p60
      %p67 = scmp.eq.s32.totalorder %s11, 3
      %p68 = por %p66, %p67
      %p69 = scmp.ne.s32.totalorder %s61, %s64
      %p70 = scmp.eq.s32.totalorder %s11, 0
      %p71 = por %p69, %p70
      %p72 = scmp.ne.s32.totalorder %s61, %s64
      %p73 = scmp.eq.s32.totalorder %s16, 3
      %p74 = por %p72, %p73
      %p75 = scmp.ne.s32.totalorder %s64, %s65
      %p76 = scmp.eq.s32.totalorder %s16, 0
      %p77 = por %p75, %p76
      %p78 = scmp.ne.s32.totalorder %s64, %s65
      %p79 = scmp.eq.s32.totalorder %s17, 3
      %p80 = por %p78, %p79
      %p82 = scmp.ne.s32.totalorder %s65, %s81
      %p83 = scmp.eq.s32.totalorder %s17, 0
      %p84 = por %p82, %p83
      %s85 = ssub.s32 %s18, %s30
      %p86 = scmp.eq.s32.totalorder %s85, 0
      %s88 = sadd.s32 %s87, 1
      %s89 = scalar_select %p86, %s87, %s88
      %p92 = pneg %p86
      %p93 = scmp.eq.s32.totalorder %s11, 3
      %p94 = por %p92, %p93
      %p95 = scmp.ne.s32.totalorder %s87, %s90
      %p96 = scmp.eq.s32.totalorder %s11, 0
      %p97 = por %p95, %p96
      %p98 = scmp.ne.s32.totalorder %s87, %s90
      %p99 = scmp.eq.s32.totalorder %s16, 3
      %p100 = por %p98, %p99
      %p101 = scmp.ne.s32.totalorder %s90, %s91
      %p102 = scmp.eq.s32.totalorder %s16, 0
      %p103 = por %p101, %p102
      %p104 = scmp.ne.s32.totalorder %s90, %s91
      %p105 = scmp.eq.s32.totalorder %s17, 3
      %p106 = por %p104, %p105
      %p108 = scmp.ne.s32.totalorder %s91, %s107
      %p109 = scmp.eq.s32.totalorder %s17, 0
      %p110 = por %p108, %p109
      %p111 = scmp.le.s32.totalorder 1, %s11
      %p112 = scmp.lt.s32.totalorder %s11, 5
      %p113 = pnand %p111, %p112
      %p114 = pneg %p113
      // Predicated region
      $region9: #{cross_entropy.1} parent=5 // pred_check
        _
      $region10: #{cross_entropy.1} parent=5 // pred_check_branch
        %116 = sbr.rel (%p113) target = $region12
      $region11: #{cross_entropy.1} parent=5 // pred_region
        %s117 = ssub.s32 %s11, 1
      $region12: #{cross_entropy.1} parent=5 // pred_fallthru
        _
      %p118 = scmp.lt.s32.totalorder %s11, 4
      // Predicated region
      $region13: #{cross_entropy.1} parent=5 // pred_check
        %p119 = pneg %p118
      $region14: #{cross_entropy.1} parent=5 // pred_check_branch
        %121 = sbr.rel (%p119) target = $region16
      $region15: #{cross_entropy.1} parent=5 // pred_region
        // Predicated region
        $region17: #{cross_entropy.1} parent=15 // pred_check
          %p122 = pneg %p45
        $region18: #{cross_entropy.1} parent=15 // pred_check_branch
          %124 = sbr.rel (%p122) target = $region20
        $region19: #{cross_entropy.1} parent=15 // pred_region
          %s125 = sand.u32 %s35, 1
          %s126 = scalar_lea.sflag [#allocation6], %s125
          %s127 = sand.u32 %s35, 1
          %s128 = smul.addr %s127, 8
          %s129 = scalar_lea.vmem [#allocation5], %s128
          %s131 = ssub.s32 128, 128
          %132 = vsyncadd %s126, %s131
          %s133 = smul.addr %s18, 2
          %s134 = sadd.s32 %s19, %s133
          %s135 = smul.addr %s134, 128
          %s136 = scalar_lea.hbm %s0, %s135
          %s138 = sshll.u32 %s129, 4
          %s139 = int_to_ptr.vmem [resolvable:$true] %s138
          %141 = dma.hbm_to_vmem [thread:$0]  %s136, 128, %s139, %s126
        $region20: #{cross_entropy.1} parent=15 // pred_fallthru
          _
        // Predicated region
        $region21: #{cross_entropy.1} parent=15 // pred_check
          %p142 = pneg %p71
        $region22: #{cross_entropy.1} parent=15 // pred_check_branch
          %144 = sbr.rel (%p142) target = $region24
        $region23: #{cross_entropy.1} parent=15 // pred_region
          %p145 = scmp.lt.s32.totalorder %s18, 1
          %s146 = scalar_select %p145, %s18, 1
          %s147 = smul.addr %s146, 8
          %s148 = scalar_lea.vmem %s1, %s147
        $region24: #{cross_entropy.1} parent=15 // pred_fallthru
          _
      $region16: #{cross_entropy.1} parent=5 // pred_fallthru
        _
      %p149 = scmp.le.s32.totalorder 1, %s11
      %p150 = scmp.lt.s32.totalorder %s11, 5
      %p151 = pnand %p149, %p150
      %p152 = pneg %p151
      // Predicated region
      $region25: #{cross_entropy.1} parent=5 // pred_check
        _
      $region26: #{cross_entropy.1} parent=5 // pred_check_branch
        %154 = sbr.rel (%p151) target = $region28
      $region27: #{cross_entropy.1} parent=5 // pred_region
        %s155 = ssub.s32 %s11, 1
        %s156 = sand.u32 %s38, 1
        %s157 = scalar_lea.sflag [#allocation6], %s156
        %s158 = sand.u32 %s38, 1
        %s159 = smul.addr %s158, 8
        %s160 = scalar_lea.vmem [#allocation5], %s159
        // Predicated region
        $region29: #{cross_entropy.1} parent=27 // pred_check
          %p161 = pneg %p51
        $region30: #{cross_entropy.1} parent=27 // pred_check_branch
          %163 = sbr.rel (%p161) target = $region32
        $region31: #{cross_entropy.1} parent=27 // pred_region
          %164 = dma.done %s157, 128
        $region32: #{cross_entropy.1} parent=27 // pred_fallthru
          _
        %s165 = sand.u32 %s38, 1
        %s166 = scalar_lea.sflag [#allocation6], %s165
        %s167 = sand.u32 %s38, 1
        %s168 = smul.addr %s167, 8
        %s169 = scalar_lea.vmem [#allocation5], %s168
        %p170 = pneg %p51
        %p171 = pneg %p48
        %p172 = scmp.lt.s32.totalorder %s20, 1
        %s173 = scalar_select %p172, %s20, 1
        %s174 = smul.addr %s173, 8
        %s175 = scalar_lea.vmem %s1, %s174
        %p176 = pneg %p77
        %p177 = pneg %p74
        %p178 = pneg %p103
        %p179 = pneg %p100
        %p180 = scmp.lt.s32.totalorder %s20, 1
        %s181 = scalar_select %p180, %s20, 1
        %s182 = smul.addr %s181, 8
        %s183 = scalar_lea.vmem %s2, %s182
        %p184 = scmp.lt.s32.totalorder %s20, 1
        %s185 = scalar_select %p184, %s20, 1
        %s186 = smul.addr %s185, 8
        %s187 = scalar_lea.vmem %s1, %s186
        %p188 = scmp.lt.s32.totalorder %s20, 1
        %s189 = scalar_select %p188, %s20, 1
        %s190 = smul.addr %s189, 8
        %s191 = scalar_lea.vmem %s2, %s190
        %p192 = scmp.eq.s32.totalorder %s21, 0
        // Predicated region
        $region33: #{cross_entropy.1} parent=27 // pred_check
          %p193 = pneg %p192
        $region34: #{cross_entropy.1} parent=27 // pred_check_branch
          %195 = sbr.rel (%p193) target = $region36
        $region35: #{cross_entropy.1} parent=27 // pred_region
          %vm196 = vcmask 7168
          %197 = vst.msk [vmem:[#allocation2] sm:$0xff] %vm196, -inf
          %198 = vst.msk [vmem:[#allocation3] sm:$0xff] %vm196, 0.0
          %199 = vst.msk [vmem:[#allocation4] sm:$0xff] %vm196, 0.0
        $region36: #{cross_entropy.1} parent=27 // pred_fallthru
          _
        %v200 = vlaneseq
        %v201 = vand.u32 %v200, 127
        %v202 = vld [vmem:[%s160] sm:$0xff]
        %s203 = smul.u32 %s21, 128
        %s204 = ssub.s32 200, %s203
        %v205 = vstv %s204
        %vm206 = vcmp.lt.s32.totalorder %v201, %v205
        %v207 = vsel %vm206, 1, 0
        %vm208 = vcmp.eq.s32.totalorder %v207, 1
        %v209 = vsel %vm208, %v202, -inf
        %210 = vmax.xlane.f32.xlu0 %v209
        %v211 = vpop.xlane.xlu0 %210
        %v212 = vld [vmem:[%s187] sm:$0xff]
        %v213 = vstv %s203
        %v214 = vsub.s32 %v212, %v213
        %v215 = vld [vmem:[#allocation4] sm:$0xff]
        %216 = vset.pattern.permute.xlu0 0
        %217 = vperm.xlu0 %216, %v214
        %v218 = vpop.permute.xlu0 %217
        %vm219 = vcmp.eq.s32.totalorder %v201, %v218
        %v220 = vsel %vm219, %v209, 0.0
        %221 = vadd.xlane.f32.xlu0 %v220
        %v222 = vpop.xlane.xlu0 %221
        %v223 = vadd.f32 %v215, %v222
        %vm224 = vcmask 7168
        %225 = vst.msk [vmem:[#allocation4] sm:$0xff] %vm224, %v223
        %v226 = vld [vmem:[#allocation2] sm:$0xff]
        %v227 = vmax.f32 %v226, %v211
        %v228 = vsub.f32 %v226, %v227
        %v229 = vmul.f32 %v228, 1.442695
        %v230 = vpow.pop %v229
        %v231 = vld [vmem:[#allocation3] sm:$0xff]
        %v232 = vmul.f32 %v231, %v230
        %234 = vset.pattern.permute.xlu0 0
        %235 = vperm.xlu0 %234, %v227
        %v236 = vpop.permute.xlu0 %235
        %v238 = vsub.f32 %v209, %v236
        %v239 = vmul.f32 %v238, 1.442695
        %v240 = vpow.pop %v239
        %241 = vadd.xlane.f32.xlu0 %v240
        %v242 = vpop.xlane.xlu0 %241
        %v243 = vadd.f32 %v232, %v242
        %244 = vst.msk [vmem:[#allocation3] sm:$0xff] %vm224, %v243
        %245 = vst.msk [vmem:[#allocation2] sm:$0xff] %vm224, %v227
        %p246 = scmp.eq.s32.totalorder %s21, 1
        // Predicated region
        $region37: #{cross_entropy.1} parent=27 // pred_check
          %p247 = pneg %p246
        $region38: #{cross_entropy.1} parent=27 // pred_check_branch
          %249 = sbr.rel (%p247) target = $region40
        $region39: #{cross_entropy.1} parent=27 // pred_region
          %v250 = vld [vmem:[#allocation2] sm:$0xff]
          %v251 = vld [vmem:[#allocation3] sm:$0xff]
          %v252 = vlog2.pop %v251
          %v253 = vmul.f32 %v252, 0.6931472
          %v254 = vadd.f32 %v250, %v253
          %v255 = vld [vmem:[#allocation4] sm:$0xff]
          %v256 = vsub.f32 %v254, %v255
          %257 = vst.msk [vmem:[%s191] sm:$0xff] %vm224, %v256
        $region40: #{cross_entropy.1} parent=27 // pred_fallthru
          _
        %p258 = scmp.lt.s32.totalorder %s20, 1
        %s259 = scalar_select %p258, %s20, 1
        %s260 = smul.addr %s259, 8
        %s261 = scalar_lea.vmem %s2, %s260
        // Predicated region
        $region41: #{cross_entropy.1} parent=27 // pred_check
          %p262 = pneg %p100
        $region42: #{cross_entropy.1} parent=27 // pred_check_branch
          %264 = sbr.rel (%p262) target = $region44
        $region43: #{cross_entropy.1} parent=27 // pred_region
          _
        $region44: #{cross_entropy.1} parent=27 // pred_fallthru
          _
      $region28: #{cross_entropy.1} parent=5 // pred_fallthru
        _
      %p265 = scmp.le.s32.totalorder 2, %s11
      // Predicated region
      $region45: #{cross_entropy.1} parent=5 // pred_check
        %p266 = pneg %p265
      $region46: #{cross_entropy.1} parent=5 // pred_check_branch
        %268 = sbr.rel (%p266) target = $region48
      $region47: #{cross_entropy.1} parent=5 // pred_region
        %s269 = ssub.s32 %s11, 2
        // Predicated region
        $region49: #{cross_entropy.1} parent=47 // pred_check
          %p270 = pneg %p106
        $region50: #{cross_entropy.1} parent=47 // pred_check_branch
          %272 = sbr.rel (%p270) target = $region52
        $region51: #{cross_entropy.1} parent=47 // pred_region
          %p273 = scmp.lt.s32.totalorder %s22, 1
          %s274 = scalar_select %p273, %s22, 1
          %s275 = smul.addr %s274, 8
          %s276 = scalar_lea.vmem %s2, %s275
        $region52: #{cross_entropy.1} parent=47 // pred_fallthru
          _
      $region48: #{cross_entropy.1} parent=5 // pred_fallthru
        _
    $region6: #{cross_entropy.1} parent=1 // loop_footer
      %s15 = sadd.s32 1, %s11
    $region7: #{cross_entropy.1} parent=1 // loop_footer_branch
      %10 = sbr.rel target = $region3
    $region8: #{cross_entropy.1} parent=1 // loop_exit
      _
    %277 = vsyncpa [#allocation6], 1
    %s278 = scalar_lea.sflag [#allocation6], 1
    %279 = vsyncpa %s278, 1

</llo_original>
